<compile_context>
chip_gen: v6e
topology: v6e:2x2x1
jax: 0.10.0
libtpu: 0.0.40
codegen_flags: <defaults>
</compile_context>

<pallas_src>
import math

import jax
import jax.numpy as jnp
from jax import lax
from jax.experimental import pallas as pl
from jax.experimental.pallas import tpu as pltpu


def lab_kernel(x_ref, cpT_ref, lut_ref, mix_ref, o_ref):
    # x_ref  : (tile_B, C)  input tile, natural (B, C) HBM layout, native dtype
    # cpT_ref: (K, C)       choice parameters, transposed (tiny parameter)
    # lut_ref: (2**K, 1)    raw LUT params, row index = d0*2^(K-1)+...+d_{K-1}
    # mix_ref: (1, 3)       lut-vs-add choice parameters
    # o_ref  : (1, tile_B)  output tile, batch on lanes (lane-dense store)
    x = x_ref[...].astype(jnp.float32)                              # cast in-kernel
    cpT = cpT_ref[...]
    K = cpT.shape[0]

    # Softmax over the candidate (lane) axis == torch.softmax(cp, dim=0).T
    m = jnp.max(cpT, axis=1, keepdims=True)
    e = jnp.exp(cpT - m)
    wT = e * pl.reciprocal(jnp.sum(e, axis=1, keepdims=True), approx=False)  # (K, C)

    # Input line signals with batch on lanes:
    #   signals_T[k, b] = sum_c wT[k, c] * x[b, c]
    # "NT" dot_general: the MXU does the batch sublane->lane crossing for us,
    # no explicit transpose of the big operand anywhere.
    signals_T = lax.dot_general(
        wT, x, (((1,), (1,)), ((), ())),
        preferred_element_type=jnp.float32,
        precision=lax.Precision.HIGHEST)                            # (K, tile_B)
    s = [signals_T[d:d + 1, :] for d in range(K)]                   # each (1, tile_B)

    # Soft LUT lookup: multilinear blend of sigmoid(lut) over the K dims.
    # s_d weights index 0, (1 - s_d) weights index 1 of dimension d.
    # (Sub-vreg sublane slices; per review this only matters if a bundle dump
    #  shows XLU/VALU binding — the kernel is HBM-bound at these tile sizes.)
    v = pl.reciprocal(1.0 + jnp.exp(-lut_ref[...]), approx=False)   # sigmoid, (2**K, 1)
    for d in range(K):
        half = v.shape[0] // 2
        v = s[d] * v[:half, :] + (1.0 - s[d]) * v[half:, :]
    lut_out = v                                                     # (1, tile_B)

    # Soft-adder path (first three input line signals).
    add = s[0] + s[1] + s[2]                                        # (1, tile_B)
    add_out1 = jnp.clip(add - 2.0, 0.0, 1.0)
    # TODO(synk): torch casts the comparison to float64; TPU has no f64, kept f32.
    add_out2 = jnp.where(add >= 2.0, 1.0, 0.0)

    # Blend LUT vs adder outputs with softmax(lut_vs_add_choice_parameters).
    mix = mix_ref[...]                                              # (1, 3)
    mm = jnp.max(mix, axis=1, keepdims=True)
    me = jnp.exp(mix - mm)
    mw = me * pl.reciprocal(jnp.sum(me, axis=1, keepdims=True), approx=False)

    o_ref[...] = (mw[:, 0:1] * lut_out
                  + mw[:, 1:2] * add_out1
                  + mw[:, 2:3] * add_out2)


def _choose_tiling(batch, max_tile=4096):
    """Pick (padded_batch, tile_b) so BlockSpec (8,128) rules hold.

    - batch <= max_tile: one full-array tile (pad batch to a multiple of 8).
    - otherwise: pad batch to a multiple of 128 and use the largest power-of-two
      multiple-of-128 tile (<= max_tile) dividing it, so the (1, tile_b) output
      blocks are lane-dense and divide 128.
    max_tile=4096 => 512 KB of f32 x per grid step: amortises the ~0.35 us
    per-step overhead on v7x's 3.2 TB/s HBM and stays tiny vs. scoped VMEM.
    """
    if batch <= max_tile:
        b_pad = -(-batch // 8) * 8
        return b_pad, b_pad
    b_pad = -(-batch // 128) * 128
    return b_pad, math.gcd(b_pad, max_tile)


def lab_forward(x, choice_parameters, lut_params, mix_params):
    B, C = x.shape
    C2, K = choice_parameters.shape
    assert C2 == C and K >= 3

    b_pad, tile_b = _choose_tiling(B)
    if b_pad != B:
        # Only hit when B is not tile-aligned; padded rows are sliced off below.
        x = jnp.pad(x, ((0, b_pad - B), (0, 0)))

    # Tiny parameter transforms only (the big operand x is passed through
    # untouched, in its native dtype and natural (B, C) layout).
    cpT = choice_parameters.astype(jnp.float32).T                   # (K, C)
    lut_col = lut_params.astype(jnp.float32).reshape(2 ** K, 1)     # (2**K, 1)
    mix = mix_params.astype(jnp.float32).reshape(1, 3)              # (1, 3)

    grid = (b_pad // tile_b,)
    n_params = C * K + 2 ** K + 3
    cost = pl.CostEstimate(
        flops=int(2 * K * C * b_pad + (3 * (2 ** K) + 24) * b_pad),
        transcendentals=int(grid[0] * n_params),
        bytes_accessed=int(x.size * x.dtype.itemsize + 4 * b_pad + 4 * n_params),
    )

    out = pl.pallas_call(
        lab_kernel,
        out_shape=jax.ShapeDtypeStruct((1, b_pad), jnp.float32),
        grid=grid,
        in_specs=[
            pl.BlockSpec((tile_b, C), lambda i: (i, 0)),     # x: batch tiles
            pl.BlockSpec((K, C), lambda i: (0, 0)),          # params: resident
            pl.BlockSpec((2 ** K, 1), lambda i: (0, 0)),
            pl.BlockSpec((1, 3), lambda i: (0, 0)),
        ],
        out_specs=pl.BlockSpec((1, tile_b), lambda i: (0, i)),
        compiler_params=pltpu.CompilerParams(
            dimension_semantics=("parallel",)),               # 2 TCs on v7x
        cost_estimate=cost,
    )(x, cpT, lut_col, mix)

    # (1, B) -> (B, 1) is a free row-major reshape of a tiny array.
    return out[:, :B].reshape(B, 1)


def lab_reference(x, choice_parameters, lut_params, mix_params):
    K = choice_parameters.shape[1]
    w = jax.nn.softmax(choice_parameters, axis=0)                  # (C, K)
    signals = jnp.dot(x.astype(jnp.float32), w,
                      precision=lax.Precision.HIGHEST)             # (B, K)
    clut = 1.0 / (1.0 + jnp.exp(-lut_params))                      # (2,)*K

    def soft_lookup(fixed):
        d = len(fixed)
        if d == K:
            return clut[tuple(fixed)]
        return (signals[:, d] * soft_lookup(fixed + [0])
                + (1.0 - signals[:, d]) * soft_lookup(fixed + [1]))

    lut_out = soft_lookup([])[:, None]
    add = signals[:, 0] + signals[:, 1] + signals[:, 2]
    add1 = jnp.clip(add - 2.0, 0.0, 1.0)[:, None]
    add2 = jnp.where(add >= 2.0, 1.0, 0.0)[:, None]
    mw = jax.nn.softmax(mix_params)
    return mw[0] * lut_out + mw[1] * add1 + mw[2] * add2


if __name__ == "__main__":
    key = jax.random.PRNGKey(0)
    k_x, k_cp, k_lut, k_mix, k_x2 = jax.random.split(key, 5)

    input_candidates = 32   # C
    input_count = 4         # K

    # nn.Parameter(torch.rand(C, K)) -> uniform [0, 1)
    choice_parameters = jax.random.uniform(
        k_cp, (input_candidates, input_count), dtype=jnp.float32)
    # nn.Parameter(torch.randn(2, 2, 2, 2))
    lut_params = jax.random.normal(
        k_lut, tuple(2 for _ in range(input_count)), dtype=jnp.float32)
    # nn.Parameter(torch.rand(3))
    mix_params = jax.random.uniform(k_mix, (3,), dtype=jnp.float32)

    # Small demo batch (single full-array tile).
    batch = 8
    x = jax.random.normal(k_x, (batch, input_candidates), dtype=jnp.float32)
    out = jax.block_until_ready(
        lab_forward(x, choice_parameters, lut_params, mix_params))
    ref = lab_reference(x, choice_parameters, lut_params, mix_params)
    assert out.shape == (batch, 1)
    assert jnp.allclose(out, ref, atol=1e-5, rtol=1e-5), (
        f"max abs err = {jnp.max(jnp.abs(out - ref))}")

    # Larger batch exercising the tiled, pipelined, megacore-parallel grid path.
    batch2 = 6144
    x2 = jax.random.normal(k_x2, (batch2, input_candidates), dtype=jnp.float32)
    out2 = jax.block_until_ready(
        lab_forward(x2, choice_parameters, lut_params, mix_params))
    ref2 = lab_reference(x2, choice_parameters, lut_params, mix_params)
    assert out2.shape == (batch2, 1)
    assert jnp.allclose(out2, ref2, atol=1e-5, rtol=1e-5), (
        f"max abs err = {jnp.max(jnp.abs(out2 - ref2))}")

    print("KERNEL_OK")
</pallas_src>

<mosaic_0001>
module attributes {stable_mosaic.version = 11 : i64} {
  func.func @lab_kernel(%arg0: i32, %arg1: memref<8x32xf32, #tpu.memory_space<vmem>>, %arg2: memref<4x32xf32, #tpu.memory_space<vmem>>, %arg3: memref<16x1xf32, #tpu.memory_space<vmem>>, %arg4: memref<1x3xf32, #tpu.memory_space<vmem>>, %arg5: memref<1x8xf32, #tpu.memory_space<vmem>>) attributes {dimension_semantics = [#tpu.dimension_semantics<parallel>], iteration_bounds = array<i64: 1>, scalar_prefetch = 0 : i64, scratch_operands = 0 : i64, tpu.core_type = #tpu.core_type<tc>, window_params = [{transform_indices = @transform_0, window_bounds = array<i64: 8, 32>}, {pipeline_mode = #tpu.pipeline_mode<synchronous>, transform_indices = @transform_1, window_bounds = array<i64: 4, 32>}, {pipeline_mode = #tpu.pipeline_mode<synchronous>, transform_indices = @transform_2, window_bounds = array<i64: 16, 1>}, {pipeline_mode = #tpu.pipeline_mode<synchronous>, transform_indices = @transform_3, window_bounds = array<i64: 1, 3>}, {transform_indices = @transform_4, window_bounds = array<i64: 1, 8>}]} {
    %c0 = arith.constant 0 : index
    %c0_0 = arith.constant 0 : index
    %0 = vector.load %arg1[%c0, %c0_0] : memref<8x32xf32, #tpu.memory_space<vmem>>, vector<8x32xf32>
    %c0_1 = arith.constant 0 : index
    %c0_2 = arith.constant 0 : index
    %1 = vector.load %arg2[%c0_1, %c0_2] : memref<4x32xf32, #tpu.memory_space<vmem>>, vector<4x32xf32>
    %cst = arith.constant dense<0xFF800000> : vector<4xf32>
    %2 = vector.multi_reduction <maximumf>, %1, %cst [1] : vector<4x32xf32> to vector<4xf32>
    %3 = vector.shape_cast %2 : vector<4xf32> to vector<4x1xf32>
    %4 = vector.broadcast %3 : vector<4x1xf32> to vector<4x32xf32>
    %5 = arith.subf %1, %4 : vector<4x32xf32>
    %6 = math.exp %5 : vector<4x32xf32>
    %cst_3 = arith.constant dense<0.000000e+00> : vector<4xf32>
    %7 = vector.multi_reduction <add>, %6, %cst_3 [1] : vector<4x32xf32> to vector<4xf32>
    %8 = vector.shape_cast %7 : vector<4xf32> to vector<4x1xf32>
    %9 = tpu.reciprocal %8 : vector<4x1xf32> -> vector<4x1xf32>
    %10 = vector.broadcast %9 : vector<4x1xf32> to vector<4x32xf32>
    %11 = arith.mulf %6, %10 : vector<4x32xf32>
    %cst_4 = arith.constant dense<0.000000e+00> : vector<4x8xf32>
    %12 = tpu.matmul %11, %0, %cst_4 {dimension_numbers = #tpu.dot_dimension_numbers<[1], [1], [0], [0], [0, 0, 1, 0], [], []>, precision = #tpu.contract_precision<fp32>} : vector<4x32xf32>, vector<8x32xf32>, vector<4x8xf32> -> vector<4x8xf32>
    %13 = vector.extract_strided_slice %12 {offsets = [0, 0], sizes = [1, 8], strides = [1, 1]} : vector<4x8xf32> to vector<1x8xf32>
    %14 = vector.extract_strided_slice %12 {offsets = [1, 0], sizes = [1, 8], strides = [1, 1]} : vector<4x8xf32> to vector<1x8xf32>
    %15 = vector.extract_strided_slice %12 {offsets = [2, 0], sizes = [1, 8], strides = [1, 1]} : vector<4x8xf32> to vector<1x8xf32>
    %16 = vector.extract_strided_slice %12 {offsets = [3, 0], sizes = [1, 8], strides = [1, 1]} : vector<4x8xf32> to vector<1x8xf32>
    %c0_5 = arith.constant 0 : index
    %c0_6 = arith.constant 0 : index
    %17 = vector.load %arg3[%c0_5, %c0_6] : memref<16x1xf32, #tpu.memory_space<vmem>>, vector<16x1xf32>
    %cst_7 = arith.constant 0.000000e+00 : f32
    %18 = vector.broadcast %cst_7 : f32 to vector<16x1xf32>
    %19 = arith.subf %18, %17 : vector<16x1xf32>
    %20 = math.exp %19 : vector<16x1xf32>
    %cst_8 = arith.constant 1.000000e+00 : f32
    %21 = vector.broadcast %cst_8 : f32 to vector<16x1xf32>
    %22 = arith.addf %21, %20 : vector<16x1xf32>
    %23 = tpu.reciprocal %22 : vector<16x1xf32> -> vector<16x1xf32>
    %24 = vector.extract_strided_slice %23 {offsets = [0, 0], sizes = [8, 1], strides = [1, 1]} : vector<16x1xf32> to vector<8x1xf32>
    %25 = vector.broadcast %13 : vector<1x8xf32> to vector<8x8xf32>
    %26 = vector.broadcast %24 : vector<8x1xf32> to vector<8x8xf32>
    %27 = arith.mulf %25, %26 : vector<8x8xf32>
    %cst_9 = arith.constant 1.000000e+00 : f32
    %28 = vector.broadcast %cst_9 : f32 to vector<1x8xf32>
    %29 = arith.subf %28, %13 : vector<1x8xf32>
    %30 = vector.extract_strided_slice %23 {offsets = [8, 0], sizes = [8, 1], strides = [1, 1]} : vector<16x1xf32> to vector<8x1xf32>
    %31 = vector.broadcast %29 : vector<1x8xf32> to vector<8x8xf32>
    %32 = vector.broadcast %30 : vector<8x1xf32> to vector<8x8xf32>
    %33 = arith.mulf %31, %32 : vector<8x8xf32>
    %34 = arith.addf %27, %33 : vector<8x8xf32>
    %35 = vector.extract_strided_slice %34 {offsets = [0, 0], sizes = [4, 8], strides = [1, 1]} : vector<8x8xf32> to vector<4x8xf32>
    %36 = vector.broadcast %14 : vector<1x8xf32> to vector<4x8xf32>
    %37 = arith.mulf %36, %35 : vector<4x8xf32>
    %cst_10 = arith.constant 1.000000e+00 : f32
    %38 = vector.broadcast %cst_10 : f32 to vector<1x8xf32>
    %39 = arith.subf %38, %14 : vector<1x8xf32>
    %40 = vector.extract_strided_slice %34 {offsets = [4, 0], sizes = [4, 8], strides = [1, 1]} : vector<8x8xf32> to vector<4x8xf32>
    %41 = vector.broadcast %39 : vector<1x8xf32> to vector<4x8xf32>
    %42 = arith.mulf %41, %40 : vector<4x8xf32>
    %43 = arith.addf %37, %42 : vector<4x8xf32>
    %44 = vector.extract_strided_slice %43 {offsets = [0, 0], sizes = [2, 8], strides = [1, 1]} : vector<4x8xf32> to vector<2x8xf32>
    %45 = vector.broadcast %15 : vector<1x8xf32> to vector<2x8xf32>
    %46 = arith.mulf %45, %44 : vector<2x8xf32>
    %cst_11 = arith.constant 1.000000e+00 : f32
    %47 = vector.broadcast %cst_11 : f32 to vector<1x8xf32>
    %48 = arith.subf %47, %15 : vector<1x8xf32>
    %49 = vector.extract_strided_slice %43 {offsets = [2, 0], sizes = [2, 8], strides = [1, 1]} : vector<4x8xf32> to vector<2x8xf32>
    %50 = vector.broadcast %48 : vector<1x8xf32> to vector<2x8xf32>
    %51 = arith.mulf %50, %49 : vector<2x8xf32>
    %52 = arith.addf %46, %51 : vector<2x8xf32>
    %53 = vector.extract_strided_slice %52 {offsets = [0, 0], sizes = [1, 8], strides = [1, 1]} : vector<2x8xf32> to vector<1x8xf32>
    %54 = arith.mulf %16, %53 : vector<1x8xf32>
    %cst_12 = arith.constant 1.000000e+00 : f32
    %55 = vector.broadcast %cst_12 : f32 to vector<1x8xf32>
    %56 = arith.subf %55, %16 : vector<1x8xf32>
    %57 = vector.extract_strided_slice %52 {offsets = [1, 0], sizes = [1, 8], strides = [1, 1]} : vector<2x8xf32> to vector<1x8xf32>
    %58 = arith.mulf %56, %57 : vector<1x8xf32>
    %59 = arith.addf %54, %58 : vector<1x8xf32>
    %60 = arith.addf %13, %14 : vector<1x8xf32>
    %61 = arith.addf %60, %15 : vector<1x8xf32>
    %cst_13 = arith.constant 2.000000e+00 : f32
    %62 = vector.broadcast %cst_13 : f32 to vector<1x8xf32>
    %63 = arith.subf %61, %62 : vector<1x8xf32>
    %cst_14 = arith.constant 0.000000e+00 : f32
    %cst_15 = arith.constant 1.000000e+00 : f32
    %64 = vector.broadcast %cst_14 : f32 to vector<1x8xf32>
    %65 = arith.maximumf %64, %63 : vector<1x8xf32>
    %66 = vector.broadcast %cst_15 : f32 to vector<1x8xf32>
    %67 = arith.minimumf %66, %65 : vector<1x8xf32>
    %cst_16 = arith.constant 2.000000e+00 : f32
    %68 = vector.broadcast %cst_16 : f32 to vector<1x8xf32>
    %69 = arith.cmpf oge, %61, %68 : vector<1x8xf32>
    %cst_17 = arith.constant 1.000000e+00 : f32
    %cst_18 = arith.constant 0.000000e+00 : f32
    %70 = vector.broadcast %cst_17 : f32 to vector<1x8xf32>
    %71 = vector.broadcast %cst_18 : f32 to vector<1x8xf32>
    %72 = arith.select %69, %70, %71 : vector<1x8xi1>, vector<1x8xf32>
    %c0_19 = arith.constant 0 : index
    %c0_20 = arith.constant 0 : index
    %73 = vector.load %arg4[%c0_19, %c0_20] : memref<1x3xf32, #tpu.memory_space<vmem>>, vector<1x3xf32>
    %cst_21 = arith.constant dense<0xFF800000> : vector<1xf32>
    %74 = vector.multi_reduction <maximumf>, %73, %cst_21 [1] : vector<1x3xf32> to vector<1xf32>
    %75 = vector.shape_cast %74 : vector<1xf32> to vector<1x1xf32>
    %76 = vector.broadcast %75 : vector<1x1xf32> to vector<1x3xf32>
    %77 = arith.subf %73, %76 : vector<1x3xf32>
    %78 = math.exp %77 : vector<1x3xf32>
    %cst_22 = arith.constant dense<0.000000e+00> : vector<1xf32>
    %79 = vector.multi_reduction <add>, %78, %cst_22 [1] : vector<1x3xf32> to vector<1xf32>
    %80 = vector.shape_cast %79 : vector<1xf32> to vector<1x1xf32>
    %81 = tpu.reciprocal %80 : vector<1x1xf32> -> vector<1x1xf32>
    %82 = vector.broadcast %81 : vector<1x1xf32> to vector<1x3xf32>
    %83 = arith.mulf %78, %82 : vector<1x3xf32>
    %84 = vector.extract_strided_slice %83 {offsets = [0, 0], sizes = [1, 1], strides = [1, 1]} : vector<1x3xf32> to vector<1x1xf32>
    %85 = vector.broadcast %84 : vector<1x1xf32> to vector<1x8xf32>
    %86 = arith.mulf %85, %59 : vector<1x8xf32>
    %87 = vector.extract_strided_slice %83 {offsets = [0, 1], sizes = [1, 1], strides = [1, 1]} : vector<1x3xf32> to vector<1x1xf32>
    %88 = vector.broadcast %87 : vector<1x1xf32> to vector<1x8xf32>
    %89 = arith.mulf %88, %67 : vector<1x8xf32>
    %90 = arith.addf %86, %89 : vector<1x8xf32>
    %91 = vector.extract_strided_slice %83 {offsets = [0, 2], sizes = [1, 1], strides = [1, 1]} : vector<1x3xf32> to vector<1x1xf32>
    %92 = vector.broadcast %91 : vector<1x1xf32> to vector<1x8xf32>
    %93 = arith.mulf %92, %72 : vector<1x8xf32>
    %94 = arith.addf %90, %93 : vector<1x8xf32>
    %c0_23 = arith.constant 0 : index
    %c0_24 = arith.constant 0 : index
    %95 = vector.load %arg5[%c0_23, %c0_24] : memref<1x8xf32, #tpu.memory_space<vmem>>, vector<1x8xf32>
    tpu.vector_store %arg5[%c0_23, %c0_24], %94 {strides = array<i32>} : memref<1x8xf32, #tpu.memory_space<vmem>>, vector<1x8xf32>,
    return
  }
  func.func @transform_0(%arg0: i32) -> (i32, i32) {
    %c0_i32 = arith.constant 0 : i32
    %c0_i32_0 = arith.constant 0 : i32
    return %arg0, %c0_i32 : i32, i32
  }
  func.func @transform_1(%arg0: i32) -> (i32, i32) {
    %c0_i32 = arith.constant 0 : i32
    %c0_i32_0 = arith.constant 0 : i32
    %c0_i32_1 = arith.constant 0 : i32
    return %c0_i32, %c0_i32_0 : i32, i32
  }
  func.func @transform_2(%arg0: i32) -> (i32, i32) {
    %c0_i32 = arith.constant 0 : i32
    %c0_i32_0 = arith.constant 0 : i32
    %c0_i32_1 = arith.constant 0 : i32
    return %c0_i32, %c0_i32_0 : i32, i32
  }
  func.func @transform_3(%arg0: i32) -> (i32, i32) {
    %c0_i32 = arith.constant 0 : i32
    %c0_i32_0 = arith.constant 0 : i32
    %c0_i32_1 = arith.constant 0 : i32
    return %c0_i32, %c0_i32_0 : i32, i32
  }
  func.func @transform_4(%arg0: i32) -> (i32, i32) {
    %c0_i32 = arith.constant 0 : i32
    %c0_i32_0 = arith.constant 0 : i32
    return %c0_i32, %arg0 : i32, i32
  }
}

</mosaic_0001>

<llo_original>
// kernel: tpu_custom_call.1
$region0: #{tpu_custom_call.1}
  #allocation0 [shape = 'u32[]', space=smem, size = 0x4, offset = 0x4, fixed_abs, tag = 'smem constant byte address 0x4 - core index']
  #allocation1 [shape = 'u32[144,128]{1,0:T(1,128)}', space=vmem, size = 0x12000, scoped, tag = 'internal scratch']
  %s0 = inlined_call_operand.vmem [shape: f32[8,32], index: 0, kind: input, shape index: {}]
  %s1 = inlined_call_operand.vmem [shape: f32[4,32], index: 1, kind: input, shape index: {}]
  %s2 = inlined_call_operand.vmem [shape: f32[16,1], index: 2, kind: input, shape index: {}]
  %s3 = inlined_call_operand.vmem [shape: f32[1,3], index: 3, kind: input, shape index: {}]
  %s4 = inlined_call_operand.hbm [shape: f32[1,8], index: 4, kind: output, shape index: {}]
  %s5 = sld [smem:[#allocation0]]
  $region26: #{tpu_custom_call.1} parent=0
    _
  %s7 = ssub.s32 1, %s5
  %s8 = scalar_select 0, %s7, %s5
  $region1: #{tpu_custom_call.1} parent=0
    #allocation2 [shape = 'u8[512]{0}', space=vmem, size = 0x400, scoped, tag = 'output window, operand 0, single buffered']
    #allocation3 [shape = 's32[1]{0}', space=sflag, size = 0x4, scoped, tag = 'scoped memory for tpu_custom_call.1']
    %9 = vsyncpa [#allocation3], 0
    // Predicated region
    $region2: #{tpu_custom_call.1} parent=1 // pred_check
      _
    $region3: #{tpu_custom_call.1} parent=1 // pred_check_branch
      %11 = sbr.rel (0) target = $region5
    $region4: #{tpu_custom_call.1} parent=1 // pred_region
      _
    $region5: #{tpu_custom_call.1} parent=1 // pred_fallthru
      _
    // Predicated region
    $region6: #{tpu_custom_call.1} parent=1 // pred_check
      _
    $region7: #{tpu_custom_call.1} parent=1 // pred_check_branch
      %13 = sbr.rel (0) target = $region9
    $region8: #{tpu_custom_call.1} parent=1 // pred_region
      _
    $region9: #{tpu_custom_call.1} parent=1 // pred_fallthru
      _
    // Predicated region
    $region10: #{tpu_custom_call.1} parent=1 // pred_check
      _
    $region11: #{tpu_custom_call.1} parent=1 // pred_check_branch
      %15 = sbr.rel (0) target = $region13
    $region12: #{tpu_custom_call.1} parent=1 // pred_region
      _
    $region13: #{tpu_custom_call.1} parent=1 // pred_fallthru
      _
    // Predicated region
    $region14: #{tpu_custom_call.1} parent=1 // pred_check
      _
    $region15: #{tpu_custom_call.1} parent=1 // pred_check_branch
      %17 = sbr.rel (0) target = $region17
    $region16: #{tpu_custom_call.1} parent=1 // pred_region
      _
    $region17: #{tpu_custom_call.1} parent=1 // pred_fallthru
      _
    %v18 = vld [vmem:[%s0] sm:$0xff]
    %v19 = vld [vmem:[%s1] sm:$0xf]
    %vm20 = vcmask 257024
    %v21 = vsel %vm20, %v19, -inf
    %22 = vmax.xlane.f32.xlu0 %v21
    %v23 = vpop.xlane.xlu0 %22
    %v24 = vsub.f32 %v19, %v23
    %v25 = vmul.f32 %v24, 1.442695
    %v26 = vpow.pop %v25
    %v27 = vsel %vm20, %v26, 0.0
    %28 = vadd.xlane.f32.xlu0 %v27
    %v29 = vpop.xlane.xlu0 %28
    %v30 = vrcp.pop %v29
    %v31 = vmul.f32 %v26, %v30
    %vm32 = vcmask 261120
    %v34 = vsel %vm32, %v31, 0
    %v37 = vsel %vm32, %v18, 0
    %39 = vmatprep.subr.mxu0 0.0
    %40 = vmatpush1.xpose.msra.mxu0 0.0
    %41 = vmatprep.subr.mxu0 0.0
    %42 = vmatpush1.xpose.msra.mxu0 0.0
    %43 = vmatprep.subr.mxu0 0.0
    %44 = vmatpush1.xpose.msra.mxu0 0.0
    %45 = vmatprep.subr.mxu0 0.0
    %46 = vmatpush1.xpose.msra.mxu0 0.0
    %47 = vmatprep.subr.mxu0 0.0
    %48 = vmatpush1.xpose.msra.mxu0 0.0
    %49 = vmatprep.subr.mxu0 0.0
    %50 = vmatpush1.xpose.msra.mxu0 0.0
    %51 = vmatprep.subr.mxu0 0.0
    %52 = vmatpush1.xpose.msra.mxu0 0.0
    %53 = vmatprep.subr.mxu0 0.0
    %54 = vmatpush1.xpose.msra.mxu0 0.0
    %55 = vmatprep.subr.mxu0 0.0
    %56 = vmatpush1.xpose.msra.mxu0 0.0
    %57 = vmatprep.subr.mxu0 0.0
    %58 = vmatpush1.xpose.msra.mxu0 0.0
    %59 = vmatprep.subr.mxu0 0.0
    %60 = vmatpush1.xpose.msra.mxu0 0.0
    %61 = vmatprep.subr.mxu0 0.0
    %62 = vmatpush1.xpose.msra.mxu0 0.0
    %63 = vmatprep.subr.mxu0 0.0
    %64 = vmatpush1.xpose.msra.mxu0 0.0
    %65 = vmatprep.subr.mxu0 0.0
    %66 = vmatpush1.xpose.msra.mxu0 0.0
    %67 = vmatprep.subr.mxu0 0.0
    %68 = vmatpush1.xpose.msra.mxu0 0.0
    %69 = vmatprep.subr.mxu0 0.0
    %v70 = vand.u32 %v37, 4294901760
    %71 = vmatpush1.xpose.msra.mxu0 %v70
    %72 = vmatprep.subr.mxu0 0.0
    %73 = vmatpush2.xpose.msra.mxu0 0.0
    %74 = vmatprep.subr.mxu0 0.0
    %75 = vmatpush2.xpose.msra.mxu0 0.0
    %76 = vmatprep.subr.mxu0 0.0
    %77 = vmatpush2.xpose.msra.mxu0 0.0
    %78 = vmatprep.subr.mxu0 0.0
    %79 = vmatpush2.xpose.msra.mxu0 0.0
    %80 = vmatprep.subr.mxu0 0.0
    %81 = vmatpush2.xpose.msra.mxu0 0.0
    %82 = vmatprep.subr.mxu0 0.0
    %83 = vmatpush2.xpose.msra.mxu0 0.0
    %84 = vmatprep.subr.mxu0 0.0
    %85 = vmatpush2.xpose.msra.mxu0 0.0
    %86 = vmatprep.subr.mxu0 0.0
    %87 = vmatpush2.xpose.msra.mxu0 0.0
    %88 = vmatprep.subr.mxu0 0.0
    %89 = vmatpush2.xpose.msra.mxu0 0.0
    %90 = vmatprep.subr.mxu0 0.0
    %91 = vmatpush2.xpose.msra.mxu0 0.0
    %92 = vmatprep.subr.mxu0 0.0
    %93 = vmatpush2.xpose.msra.mxu0 0.0
    %94 = vmatprep.subr.mxu0 0.0
    %95 = vmatpush2.xpose.msra.mxu0 0.0
    %96 = vmatprep.subr.mxu0 0.0
    %97 = vmatpush2.xpose.msra.mxu0 0.0
    %98 = vmatprep.subr.mxu0 0.0
    %99 = vmatpush2.xpose.msra.mxu0 0.0
    %100 = vmatprep.subr.mxu0 0.0
    %101 = vmatpush2.xpose.msra.mxu0 0.0
    %102 = vmatprep.subr.mxu0 0.0
    %103 = vmatpush2.xpose.msra.mxu0 0.0
    %104 = vmatprep.mubr.f32.mxu0 0.0
    %v105 = vand.u32 %v34, 4294901760
    %v106 = vsub.f32 %v34, %v105
    %v107 = vand.u32 %v106, 4294901760
    %v108 = vsub.f32 %v106, %v107
    %v109 = vand.u32 %v108, 4294901760
    %110 = vmatmul.mubr.f32.gmra.mxu0 %v109
    %v111 = vpop.f32.mrf.mxu0
    %v112 = vadd.f32 0.0, %v111
    %v113 = vpop.f32.mrf.mxu0
    %114 = vdwg.mxu0
    %115 = vmatprep.subr.mxu0 0.0
    %116 = vmatpush1.xpose.msra.mxu0 0.0
    %117 = vmatprep.subr.mxu0 0.0
    %118 = vmatpush1.xpose.msra.mxu0 0.0
    %119 = vmatprep.subr.mxu0 0.0
    %120 = vmatpush1.xpose.msra.mxu0 0.0
    %121 = vmatprep.subr.mxu0 0.0
    %122 = vmatpush1.xpose.msra.mxu0 0.0
    %123 = vmatprep.subr.mxu0 0.0
    %124 = vmatpush1.xpose.msra.mxu0 0.0
    %125 = vmatprep.subr.mxu0 0.0
    %126 = vmatpush1.xpose.msra.mxu0 0.0
    %127 = vmatprep.subr.mxu0 0.0
    %128 = vmatpush1.xpose.msra.mxu0 0.0
    %129 = vmatprep.subr.mxu0 0.0
    %130 = vmatpush1.xpose.msra.mxu0 0.0
    %131 = vmatprep.subr.mxu0 0.0
    %132 = vmatpush1.xpose.msra.mxu0 0.0
    %133 = vmatprep.subr.mxu0 0.0
    %134 = vmatpush1.xpose.msra.mxu0 0.0
    %135 = vmatprep.subr.mxu0 0.0
    %136 = vmatpush1.xpose.msra.mxu0 0.0
    %137 = vmatprep.subr.mxu0 0.0
    %138 = vmatpush1.xpose.msra.mxu0 0.0
    %139 = vmatprep.subr.mxu0 0.0
    %140 = vmatpush1.xpose.msra.mxu0 0.0
    %141 = vmatprep.subr.mxu0 0.0
    %142 = vmatpush1.xpose.msra.mxu0 0.0
    %143 = vmatprep.subr.mxu0 0.0
    %144 = vmatpush1.xpose.msra.mxu0 0.0
    %145 = vmatprep.subr.mxu0 0.0
    %v146 = vand.u32 %v37, 4294901760
    %v147 = vsub.f32 %v37, %v146
    %v148 = vand.u32 %v147, 4294901760
    %v149 = vsub.f32 %v147, %v148
    %v150 = vand.u32 %v149, 4294901760
    %151 = vmatpush1.xpose.msra.mxu0 %v150
    %152 = vmatprep.subr.mxu0 0.0
    %153 = vmatpush2.xpose.msra.mxu0 0.0
    %154 = vmatprep.subr.mxu0 0.0
    %155 = vmatpush2.xpose.msra.mxu0 0.0
    %156 = vmatprep.subr.mxu0 0.0
    %157 = vmatpush2.xpose.msra.mxu0 0.0
    %158 = vmatprep.subr.mxu0 0.0
    %159 = vmatpush2.xpose.msra.mxu0 0.0
    %160 = vmatprep.subr.mxu0 0.0
    %161 = vmatpush2.xpose.msra.mxu0 0.0
    %162 = vmatprep.subr.mxu0 0.0
    %163 = vmatpush2.xpose.msra.mxu0 0.0
    %164 = vmatprep.subr.mxu0 0.0
    %165 = vmatpush2.xpose.msra.mxu0 0.0
    %166 = vmatprep.subr.mxu0 0.0
    %167 = vmatpush2.xpose.msra.mxu0 0.0
    %168 = vmatprep.subr.mxu0 0.0
    %169 = vmatpush2.xpose.msra.mxu0 0.0
    %170 = vmatprep.subr.mxu0 0.0
    %171 = vmatpush2.xpose.msra.mxu0 0.0
    %172 = vmatprep.subr.mxu0 0.0
    %173 = vmatpush2.xpose.msra.mxu0 0.0
    %174 = vmatprep.subr.mxu0 0.0
    %175 = vmatpush2.xpose.msra.mxu0 0.0
    %176 = vmatprep.subr.mxu0 0.0
    %177 = vmatpush2.xpose.msra.mxu0 0.0
    %178 = vmatprep.subr.mxu0 0.0
    %179 = vmatpush2.xpose.msra.mxu0 0.0
    %180 = vmatprep.subr.mxu0 0.0
    %181 = vmatpush2.xpose.msra.mxu0 0.0
    %182 = vmatprep.subr.mxu0 0.0
    %183 = vmatpush2.xpose.msra.mxu0 0.0
    %184 = vmatprep.mubr.f32.mxu0 0.0
    %v185 = vand.u32 %v34, 4294901760
    %186 = vmatmul.mubr.f32.gmra.mxu0 %v185
    %v187 = vpop.f32.mrf.mxu0
    %v188 = vadd.f32 %v112, %v187
    %v189 = vpop.f32.mrf.mxu0
    %190 = vdwg.mxu0
    %191 = vmatprep.subr.mxu0 0.0
    %192 = vmatpush1.xpose.msra.mxu0 0.0
    %193 = vmatprep.subr.mxu0 0.0
    %194 = vmatpush1.xpose.msra.mxu0 0.0
    %195 = vmatprep.subr.mxu0 0.0
    %196 = vmatpush1.xpose.msra.mxu0 0.0
    %197 = vmatprep.subr.mxu0 0.0
    %198 = vmatpush1.xpose.msra.mxu0 0.0
    %199 = vmatprep.subr.mxu0 0.0
    %200 = vmatpush1.xpose.msra.mxu0 0.0
    %201 = vmatprep.subr.mxu0 0.0
    %202 = vmatpush1.xpose.msra.mxu0 0.0
    %203 = vmatprep.subr.mxu0 0.0
    %204 = vmatpush1.xpose.msra.mxu0 0.0
    %205 = vmatprep.subr.mxu0 0.0
    %206 = vmatpush1.xpose.msra.mxu0 0.0
    %207 = vmatprep.subr.mxu0 0.0
    %208 = vmatpush1.xpose.msra.mxu0 0.0
    %209 = vmatprep.subr.mxu0 0.0
    %210 = vmatpush1.xpose.msra.mxu0 0.0
    %211 = vmatprep.subr.mxu0 0.0
    %212 = vmatpush1.xpose.msra.mxu0 0.0
    %213 = vmatprep.subr.mxu0 0.0
    %214 = vmatpush1.xpose.msra.mxu0 0.0
    %215 = vmatprep.subr.mxu0 0.0
    %216 = vmatpush1.xpose.msra.mxu0 0.0
    %217 = vmatprep.subr.mxu0 0.0
    %218 = vmatpush1.xpose.msra.mxu0 0.0
    %219 = vmatprep.subr.mxu0 0.0
    %220 = vmatpush1.xpose.msra.mxu0 0.0
    %221 = vmatprep.subr.mxu0 0.0
    %v222 = vand.u32 %v37, 4294901760
    %v223 = vsub.f32 %v37, %v222
    %224 = vmatpush1.xpose.msra.mxu0 %v223
    %225 = vmatprep.subr.mxu0 0.0
    %226 = vmatpush2.xpose.msra.mxu0 0.0
    %227 = vmatprep.subr.mxu0 0.0
    %228 = vmatpush2.xpose.msra.mxu0 0.0
    %229 = vmatprep.subr.mxu0 0.0
    %230 = vmatpush2.xpose.msra.mxu0 0.0
    %231 = vmatprep.subr.mxu0 0.0
    %232 = vmatpush2.xpose.msra.mxu0 0.0
    %233 = vmatprep.subr.mxu0 0.0
    %234 = vmatpush2.xpose.msra.mxu0 0.0
    %235 = vmatprep.subr.mxu0 0.0
    %236 = vmatpush2.xpose.msra.mxu0 0.0
    %237 = vmatprep.subr.mxu0 0.0
    %238 = vmatpush2.xpose.msra.mxu0 0.0
    %239 = vmatprep.subr.mxu0 0.0
    %240 = vmatpush2.xpose.msra.mxu0 0.0
    %241 = vmatprep.subr.mxu0 0.0
    %242 = vmatpush2.xpose.msra.mxu0 0.0
    %243 = vmatprep.subr.mxu0 0.0
    %244 = vmatpush2.xpose.msra.mxu0 0.0
    %245 = vmatprep.subr.mxu0 0.0
    %246 = vmatpush2.xpose.msra.mxu0 0.0
    %247 = vmatprep.subr.mxu0 0.0
    %248 = vmatpush2.xpose.msra.mxu0 0.0
    %249 = vmatprep.subr.mxu0 0.0
    %250 = vmatpush2.xpose.msra.mxu0 0.0
    %251 = vmatprep.subr.mxu0 0.0
    %252 = vmatpush2.xpose.msra.mxu0 0.0
    %253 = vmatprep.subr.mxu0 0.0
    %254 = vmatpush2.xpose.msra.mxu0 0.0
    %255 = vmatprep.subr.mxu0 0.0
    %256 = vmatpush2.xpose.msra.mxu0 0.0
    %257 = vmatprep.mubr.f32.mxu0 0.0
    %v258 = vand.u32 %v34, 4294901760
    %v259 = vsub.f32 %v34, %v258
    %260 = vmatmul.mubr.f32.gmra.mxu0 %v259
    %v261 = vpop.f32.mrf.mxu0
    %v262 = vadd.f32 %v188, %v261
    %v263 = vpop.f32.mrf.mxu0
    %264 = vdwg.mxu0
    %265 = vmatprep.subr.mxu0 0.0
    %266 = vmatpush1.xpose.msra.mxu0 0.0
    %267 = vmatprep.subr.mxu0 0.0
    %268 = vmatpush1.xpose.msra.mxu0 0.0
    %269 = vmatprep.subr.mxu0 0.0
    %270 = vmatpush1.xpose.msra.mxu0 0.0
    %271 = vmatprep.subr.mxu0 0.0
    %272 = vmatpush1.xpose.msra.mxu0 0.0
    %273 = vmatprep.subr.mxu0 0.0
    %274 = vmatpush1.xpose.msra.mxu0 0.0
    %275 = vmatprep.subr.mxu0 0.0
    %276 = vmatpush1.xpose.msra.mxu0 0.0
    %277 = vmatprep.subr.mxu0 0.0
    %278 = vmatpush1.xpose.msra.mxu0 0.0
    %279 = vmatprep.subr.mxu0 0.0
    %280 = vmatpush1.xpose.msra.mxu0 0.0
    %281 = vmatprep.subr.mxu0 0.0
    %282 = vmatpush1.xpose.msra.mxu0 0.0
    %283 = vmatprep.subr.mxu0 0.0
    %284 = vmatpush1.xpose.msra.mxu0 0.0
    %285 = vmatprep.subr.mxu0 0.0
    %286 = vmatpush1.xpose.msra.mxu0 0.0
    %287 = vmatprep.subr.mxu0 0.0
    %288 = vmatpush1.xpose.msra.mxu0 0.0
    %289 = vmatprep.subr.mxu0 0.0
    %290 = vmatpush1.xpose.msra.mxu0 0.0
    %291 = vmatprep.subr.mxu0 0.0
    %292 = vmatpush1.xpose.msra.mxu0 0.0
    %293 = vmatprep.subr.mxu0 0.0
    %294 = vmatpush1.xpose.msra.mxu0 0.0
    %295 = vmatprep.subr.mxu0 0.0
    %v296 = vand.u32 %v37, 4294901760
    %297 = vmatpush1.xpose.msra.mxu0 %v296
    %298 = vmatprep.subr.mxu0 0.0
    %299 = vmatpush2.xpose.msra.mxu0 0.0
    %300 = vmatprep.subr.mxu0 0.0
    %301 = vmatpush2.xpose.msra.mxu0 0.0
    %302 = vmatprep.subr.mxu0 0.0
    %303 = vmatpush2.xpose.msra.mxu0 0.0
    %304 = vmatprep.subr.mxu0 0.0
    %305 = vmatpush2.xpose.msra.mxu0 0.0
    %306 = vmatprep.subr.mxu0 0.0
    %307 = vmatpush2.xpose.msra.mxu0 0.0
    %308 = vmatprep.subr.mxu0 0.0
    %309 = vmatpush2.xpose.msra.mxu0 0.0
    %310 = vmatprep.subr.mxu0 0.0
    %311 = vmatpush2.xpose.msra.mxu0 0.0
    %312 = vmatprep.subr.mxu0 0.0
    %313 = vmatpush2.xpose.msra.mxu0 0.0
    %314 = vmatprep.subr.mxu0 0.0
    %315 = vmatpush2.xpose.msra.mxu0 0.0
    %316 = vmatprep.subr.mxu0 0.0
    %317 = vmatpush2.xpose.msra.mxu0 0.0
    %318 = vmatprep.subr.mxu0 0.0
    %319 = vmatpush2.xpose.msra.mxu0 0.0
    %320 = vmatprep.subr.mxu0 0.0
    %321 = vmatpush2.xpose.msra.mxu0 0.0
    %322 = vmatprep.subr.mxu0 0.0
    %323 = vmatpush2.xpose.msra.mxu0 0.0
    %324 = vmatprep.subr.mxu0 0.0
    %325 = vmatpush2.xpose.msra.mxu0 0.0
    %326 = vmatprep.subr.mxu0 0.0
    %327 = vmatpush2.xpose.msra.mxu0 0.0
    %328 = vmatprep.subr.mxu0 0.0
    %329 = vmatpush2.xpose.msra.mxu0 0.0
    %330 = vmatprep.mubr.f32.mxu0 0.0
    %v331 = vand.u32 %v34, 4294901760
    %v332 = vsub.f32 %v34, %v331
    %v333 = vand.u32 %v332, 4294901760
    %334 = vmatmul.mubr.f32.gmra.mxu0 %v333
    %v335 = vpop.f32.mrf.mxu0
    %v336 = vadd.f32 %v262, %v335
    %v337 = vpop.f32.mrf.mxu0
    %338 = vdwg.mxu0
    %339 = vmatprep.subr.mxu0 0.0
    %340 = vmatpush1.xpose.msra.mxu0 0.0
    %341 = vmatprep.subr.mxu0 0.0
    %342 = vmatpush1.xpose.msra.mxu0 0.0
    %343 = vmatprep.subr.mxu0 0.0
    %344 = vmatpush1.xpose.msra.mxu0 0.0
    %345 = vmatprep.subr.mxu0 0.0
    %346 = vmatpush1.xpose.msra.mxu0 0.0
    %347 = vmatprep.subr.mxu0 0.0
    %348 = vmatpush1.xpose.msra.mxu0 0.0
    %349 = vmatprep.subr.mxu0 0.0
    %350 = vmatpush1.xpose.msra.mxu0 0.0
    %351 = vmatprep.subr.mxu0 0.0
    %352 = vmatpush1.xpose.msra.mxu0 0.0
    %353 = vmatprep.subr.mxu0 0.0
    %354 = vmatpush1.xpose.msra.mxu0 0.0
    %355 = vmatprep.subr.mxu0 0.0
    %356 = vmatpush1.xpose.msra.mxu0 0.0
    %357 = vmatprep.subr.mxu0 0.0
    %358 = vmatpush1.xpose.msra.mxu0 0.0
    %359 = vmatprep.subr.mxu0 0.0
    %360 = vmatpush1.xpose.msra.mxu0 0.0
    %361 = vmatprep.subr.mxu0 0.0
    %362 = vmatpush1.xpose.msra.mxu0 0.0
    %363 = vmatprep.subr.mxu0 0.0
    %364 = vmatpush1.xpose.msra.mxu0 0.0
    %365 = vmatprep.subr.mxu0 0.0
    %366 = vmatpush1.xpose.msra.mxu0 0.0
    %367 = vmatprep.subr.mxu0 0.0
    %368 = vmatpush1.xpose.msra.mxu0 0.0
    %369 = vmatprep.subr.mxu0 0.0
    %v370 = vand.u32 %v37, 4294901760
    %v371 = vsub.f32 %v37, %v370
    %v372 = vand.u32 %v371, 4294901760
    %373 = vmatpush1.xpose.msra.mxu0 %v372
    %374 = vmatprep.subr.mxu0 0.0
    %375 = vmatpush2.xpose.msra.mxu0 0.0
    %376 = vmatprep.subr.mxu0 0.0
    %377 = vmatpush2.xpose.msra.mxu0 0.0
    %378 = vmatprep.subr.mxu0 0.0
    %379 = vmatpush2.xpose.msra.mxu0 0.0
    %380 = vmatprep.subr.mxu0 0.0
    %381 = vmatpush2.xpose.msra.mxu0 0.0
    %382 = vmatprep.subr.mxu0 0.0
    %383 = vmatpush2.xpose.msra.mxu0 0.0
    %384 = vmatprep.subr.mxu0 0.0
    %385 = vmatpush2.xpose.msra.mxu0 0.0
    %386 = vmatprep.subr.mxu0 0.0
    %387 = vmatpush2.xpose.msra.mxu0 0.0
    %388 = vmatprep.subr.mxu0 0.0
    %389 = vmatpush2.xpose.msra.mxu0 0.0
    %390 = vmatprep.subr.mxu0 0.0
    %391 = vmatpush2.xpose.msra.mxu0 0.0
    %392 = vmatprep.subr.mxu0 0.0
    %393 = vmatpush2.xpose.msra.mxu0 0.0
    %394 = vmatprep.subr.mxu0 0.0
    %395 = vmatpush2.xpose.msra.mxu0 0.0
    %396 = vmatprep.subr.mxu0 0.0
    %397 = vmatpush2.xpose.msra.mxu0 0.0
    %398 = vmatprep.subr.mxu0 0.0
    %399 = vmatpush2.xpose.msra.mxu0 0.0
    %400 = vmatprep.subr.mxu0 0.0
    %401 = vmatpush2.xpose.msra.mxu0 0.0
    %402 = vmatprep.subr.mxu0 0.0
    %403 = vmatpush2.xpose.msra.mxu0 0.0
    %404 = vmatprep.subr.mxu0 0.0
    %405 = vmatpush2.xpose.msra.mxu0 0.0
    %406 = vmatprep.mubr.f32.mxu0 0.0
    %v407 = vand.u32 %v34, 4294901760
    %408 = vmatmul.mubr.f32.gmra.mxu0 %v407
    %v409 = vpop.f32.mrf.mxu0
    %v410 = vadd.f32 %v336, %v409
    %v411 = vpop.f32.mrf.mxu0
    %412 = vdwg.mxu0
    %413 = vmatprep.subr.mxu0 0.0
    %414 = vmatpush1.xpose.msra.mxu0 0.0
    %415 = vmatprep.subr.mxu0 0.0
    %416 = vmatpush1.xpose.msra.mxu0 0.0
    %417 = vmatprep.subr.mxu0 0.0
    %418 = vmatpush1.xpose.msra.mxu0 0.0
    %419 = vmatprep.subr.mxu0 0.0
    %420 = vmatpush1.xpose.msra.mxu0 0.0
    %421 = vmatprep.subr.mxu0 0.0
    %422 = vmatpush1.xpose.msra.mxu0 0.0
    %423 = vmatprep.subr.mxu0 0.0
    %424 = vmatpush1.xpose.msra.mxu0 0.0
    %425 = vmatprep.subr.mxu0 0.0
    %426 = vmatpush1.xpose.msra.mxu0 0.0
    %427 = vmatprep.subr.mxu0 0.0
    %428 = vmatpush1.xpose.msra.mxu0 0.0
    %429 = vmatprep.subr.mxu0 0.0
    %430 = vmatpush1.xpose.msra.mxu0 0.0
    %431 = vmatprep.subr.mxu0 0.0
    %432 = vmatpush1.xpose.msra.mxu0 0.0
    %433 = vmatprep.subr.mxu0 0.0
    %434 = vmatpush1.xpose.msra.mxu0 0.0
    %435 = vmatprep.subr.mxu0 0.0
    %436 = vmatpush1.xpose.msra.mxu0 0.0
    %437 = vmatprep.subr.mxu0 0.0
    %438 = vmatpush1.xpose.msra.mxu0 0.0
    %439 = vmatprep.subr.mxu0 0.0
    %440 = vmatpush1.xpose.msra.mxu0 0.0
    %441 = vmatprep.subr.mxu0 0.0
    %442 = vmatpush1.xpose.msra.mxu0 0.0
    %443 = vmatprep.subr.mxu0 0.0
    %v444 = vand.u32 %v37, 4294901760
    %445 = vmatpush1.xpose.msra.mxu0 %v444
    %446 = vmatprep.subr.mxu0 0.0
    %447 = vmatpush2.xpose.msra.mxu0 0.0
    %448 = vmatprep.subr.mxu0 0.0
    %449 = vmatpush2.xpose.msra.mxu0 0.0
    %450 = vmatprep.subr.mxu0 0.0
    %451 = vmatpush2.xpose.msra.mxu0 0.0
    %452 = vmatprep.subr.mxu0 0.0
    %453 = vmatpush2.xpose.msra.mxu0 0.0
    %454 = vmatprep.subr.mxu0 0.0
    %455 = vmatpush2.xpose.msra.mxu0 0.0
    %456 = vmatprep.subr.mxu0 0.0
    %457 = vmatpush2.xpose.msra.mxu0 0.0
    %458 = vmatprep.subr.mxu0 0.0
    %459 = vmatpush2.xpose.msra.mxu0 0.0
    %460 = vmatprep.subr.mxu0 0.0
    %461 = vmatpush2.xpose.msra.mxu0 0.0
    %462 = vmatprep.subr.mxu0 0.0
    %463 = vmatpush2.xpose.msra.mxu0 0.0
    %464 = vmatprep.subr.mxu0 0.0
    %465 = vmatpush2.xpose.msra.mxu0 0.0
    %466 = vmatprep.subr.mxu0 0.0
    %467 = vmatpush2.xpose.msra.mxu0 0.0
    %468 = vmatprep.subr.mxu0 0.0
    %469 = vmatpush2.xpose.msra.mxu0 0.0
    %470 = vmatprep.subr.mxu0 0.0
    %471 = vmatpush2.xpose.msra.mxu0 0.0
    %472 = vmatprep.subr.mxu0 0.0
    %473 = vmatpush2.xpose.msra.mxu0 0.0
    %474 = vmatprep.subr.mxu0 0.0
    %475 = vmatpush2.xpose.msra.mxu0 0.0
    %476 = vmatprep.subr.mxu0 0.0
    %477 = vmatpush2.xpose.msra.mxu0 0.0
    %478 = vmatprep.mubr.f32.mxu0 0.0
    %v479 = vand.u32 %v34, 4294901760
    %480 = vmatmul.mubr.f32.gmra.mxu0 %v479
    %v481 = vpop.f32.mrf.mxu0
    %v482 = vadd.f32 %v410, %v481
    %v483 = vpop.f32.mrf.mxu0
    %484 = vdwg.mxu0
    %v485 = vld [vmem:[%s2] sm:$0xff]
    %v486 = vld [vmem:[%s2 + $0x8] sm:$0xff]
    %v487 = vsub.f32 0.0, %v485
    %v488 = vsub.f32 0.0, %v486
    %v489 = vmul.f32 %v487, 1.442695
    %v490 = vpow.pop %v489
    %v491 = vmul.f32 %v488, 1.442695
    %v492 = vpow.pop %v491
    %v493 = vadd.f32 %v490, 1.0
    %v494 = vadd.f32 %v492, 1.0
    %v495 = vrcp.pop %v493
    %v496 = vrcp.pop %v494
    %v497 = vlaneseq
    %v498 = vshrl.u32 %v497, 7
    %v499 = vsub.s32 0, %v498
    %v500 = vrot.slane %v482, %v499
    %502 = vset.pattern.permute.xlu0 0
    %503 = vperm.xlu0 %502, %v495
    %v504 = vpop.permute.xlu0 %503
    %v506 = vmul.f32 %v500, %v504
    %v507 = vsub.f32 1.0, %v482
    %v508 = vlaneseq
    %v509 = vshrl.u32 %v508, 7
    %v510 = vsub.s32 0, %v509
    %v511 = vrot.slane %v507, %v510
    %513 = vset.pattern.permute.xlu0 0
    %514 = vperm.xlu0 %513, %v496
    %v515 = vpop.permute.xlu0 %514
    %v517 = vmul.f32 %v511, %v515
    %v518 = vadd.f32 %v506, %v517
    %v519 = vlaneseq
    %v520 = vshrl.u32 %v519, 7
    %v521 = vsub.s32 1, %v520
    %v522 = vrot.slane %v482, %v521
    %v523 = vmul.f32 %v522, %v518
    %v524 = vlaneseq
    %v525 = vshrl.u32 %v524, 7
    %v526 = vsub.s32 1, %v525
    %v527 = vrot.slane %v507, %v526
    %v528 = vmul.f32 %v527, %v518
    %v530 = vrot.slane %v528, 4
    %v532 = vadd.f32 %v523, %v530
    %v533 = vlaneseq
    %v534 = vshrl.u32 %v533, 7
    %v535 = vsub.s32 2, %v534
    %v536 = vrot.slane %v482, %v535
    %v537 = vmul.f32 %v536, %v532
    %v538 = vlaneseq
    %v539 = vshrl.u32 %v538, 7
    %v540 = vsub.s32 2, %v539
    %v541 = vrot.slane %v507, %v540
    %v542 = vmul.f32 %v541, %v532
    %v544 = vrot.slane %v542, 2
    %v546 = vadd.f32 %v537, %v544
    %v548 = vrot.slane %v546, 5
    %v550 = vmul.f32 %v482, %v548
    %v551 = vrot.slane %v546, 6
    %v553 = vmul.f32 %v507, %v551
    %v554 = vadd.f32 %v550, %v553
    %v556 = vrot.slane %v482, 1
    %v558 = vadd.f32 %v482, %v556
    %v559 = vrot.slane %v482, 2
    %v561 = vadd.f32 %v558, %v559
    %v562 = vsub.f32 %v561, 2.0
    %v563 = vmax.f32 %v562, 0.0
    %v564 = vmin.f32 %v563, 1.0
    %vm565 = vcmp.ge.f32.partialorder %v561, 2.0
    %v566 = vsel %vm565, 1.0, 0.0
    %v567 = vld [vmem:[%s3] sm:$0x1]
    %vm568 = vcmask 16384
    %v569 = vsel %vm568, %v567, -inf
    %570 = vmax.xlane.f32.xlu0 %v569
    %v571 = vpop.xlane.xlu0 %570
    %v572 = vsub.f32 %v567, %v571
    %v573 = vmul.f32 %v572, 1.442695
    %v574 = vpow.pop %v573
    %v575 = vsel %vm568, %v574, 0.0
    %576 = vadd.xlane.f32.xlu0 %v575
    %v577 = vpop.xlane.xlu0 %576
    %v578 = vrcp.pop %v577
    %v579 = vmul.f32 %v574, %v578
    %581 = vset.pattern.permute.xlu0 0
    %582 = vperm.xlu0 %581, %v579
    %v583 = vpop.permute.xlu0 %582
    %v585 = vlaneseq
    %v586 = vshrl.u32 %v585, 7
    %v587 = vsub.s32 0, %v586
    %v588 = vrot.slane %v583, %v587
    %v589 = vmul.f32 %v588, %v554
    %590 = vset.pattern.permute.xlu0 1
    %591 = vperm.xlu0 %590, %v579
    %v592 = vpop.permute.xlu0 %591
    %v594 = vlaneseq
    %v595 = vshrl.u32 %v594, 7
    %v596 = vsub.s32 0, %v595
    %v597 = vrot.slane %v592, %v596
    %v598 = vmul.f32 %v597, %v564
    %v600 = vrot.slane %v598, 5
    %v602 = vadd.f32 %v589, %v600
    %603 = vset.pattern.permute.xlu0 2
    %604 = vperm.xlu0 %603, %v579
    %v605 = vpop.permute.xlu0 %604
    %v607 = vlaneseq
    %v608 = vshrl.u32 %v607, 7
    %v609 = vsub.s32 0, %v608
    %v610 = vrot.slane %v605, %v609
    %v611 = vmul.f32 %v610, %v566
    %v613 = vrot.slane %v611, 5
    %v615 = vadd.f32 %v602, %v613
    %vm616 = vcmask 60419
    %617 = vst.msk [vmem:[#allocation2 - $0x3] sm:$0x8] %vm616, %v615
    // Predicated region
    $region18: #{tpu_custom_call.1} parent=1 // pred_check
      _
    $region19: #{tpu_custom_call.1} parent=1 // pred_check_branch
      %619 = sbr.rel (0) target = $region21
    $region20: #{tpu_custom_call.1} parent=1 // pred_region
      %s621 = ssub.s32 16, 16
      %622 = vsyncadd [#allocation3], %s621
      %s624 = sshll.u32 [#allocation2], 4
      %s625 = int_to_ptr.vmem [resolvable:$true] %s624
      %627 = dma.vmem_to_hbm [thread:$0]  %s625, 16, %s4, [#allocation3]
    $region21: #{tpu_custom_call.1} parent=1 // pred_fallthru
      _
    // Predicated region
    $region22: #{tpu_custom_call.1} parent=1 // pred_check
      _
    $region23: #{tpu_custom_call.1} parent=1 // pred_check_branch
      %629 = sbr.rel (0) target = $region25
    $region24: #{tpu_custom_call.1} parent=1 // pred_region
      %630 = dma.done [#allocation3], 16
    $region25: #{tpu_custom_call.1} parent=1 // pred_fallthru
      _
    %631 = vsyncpa [#allocation3], 1

</llo_original>
